<compile_context>
chip_gen: v7x
topology: tpu7x:2x2x1
jax: 0.10.0
libtpu: 0.0.40
codegen_flags: <defaults>
</compile_context>

<pallas_src>
import functools

import jax
import jax.numpy as jnp
from jax.experimental import pallas as pl
from jax.experimental.pallas import tpu as pltpu


_LANE = 128


def _default_matmul_dtype():
    """bf16 MXU operands on v6e/v7x, f32 elsewhere."""
    try:
        kind = jax.devices()[0].device_kind.lower()
    except Exception:
        return jnp.float32
    if "v6" in kind or "v7" in kind:
        return jnp.bfloat16
    return jnp.float32


def _affine_small_k(w, b, x):
    """b + W @ x as rank-1 VPU broadcast FMAs (for tiny contraction dims).

    w: [out, k], b: [out, 1], x: [k, tb]  ->  [out, tb]
    """
    out = b + w[:, 0:1] * x[0:1, :]
    for k in range(1, w.shape[1]):
        out = out + w[:, k:k + 1] * x[k:k + 1, :]
    return out


# ----------------------------------------------------------------------------
# Kernels (transposed, batch-in-lanes layout)
# ----------------------------------------------------------------------------
def _mlp_kernel(num_hidden, input_dim, matmul_dtype, x_ref, *refs):
    """Fused MLP forward.

    refs layout:
      w_in [n, in], b_in [n, 1],
      (w_h [nh, n, n], b_h [nh, n, 1])   -- only if num_hidden > 0
      w_out [out, n], b_out [out, 1],
      o_ref [out, tb]
    """
    o_ref = refs[-1]
    w_in_ref, b_in_ref = refs[0], refs[1]
    if num_hidden > 0:
        w_h_ref, b_h_ref = refs[2], refs[3]
        w_out_ref, b_out_ref = refs[4], refs[5]
    else:
        w_out_ref, b_out_ref = refs[2], refs[3]

    x = x_ref[...].astype(jnp.float32)                      # [in, tb]

    # ---- input layer -------------------------------------------------------
    if input_dim <= 8:
        # Tiny K: a couple of VPU broadcast FMAs beat a mostly-padded MXU pass.
        pre = _affine_small_k(w_in_ref[...], b_in_ref[...], x)
    else:
        pre = jnp.dot(w_in_ref[...].astype(matmul_dtype), x.astype(matmul_dtype),
                      preferred_element_type=jnp.float32) + b_in_ref[...]
    h = jnp.tanh(pre)                                       # [n, tb] f32 (EUP)

    # ---- hidden layers (statically unrolled; num_hidden is small) ----------
    for l in range(num_hidden):
        w_l = w_h_ref[l].astype(matmul_dtype)               # [n, n]
        pre = jnp.dot(w_l, h.astype(matmul_dtype),
                      preferred_element_type=jnp.float32) + b_h_ref[l]
        h = jnp.tanh(pre)

    # ---- output layer (no activation) ---------------------------------------
    out = jnp.dot(w_out_ref[...].astype(matmul_dtype), h.astype(matmul_dtype),
                  preferred_element_type=jnp.float32) + b_out_ref[...]
    o_ref[...] = out.astype(o_ref.dtype)                    # lane-dense store


def _linear_kernel(input_dim, matmul_dtype, x_ref, w_ref, b_ref, o_ref):
    """layers == 0 branch: simple linear regression layer."""
    x = x_ref[...].astype(jnp.float32)
    if input_dim <= 8:
        out = _affine_small_k(w_ref[...], b_ref[...], x)
    else:
        out = jnp.dot(w_ref[...].astype(matmul_dtype), x.astype(matmul_dtype),
                      preferred_element_type=jnp.float32) + b_ref[...]
    o_ref[...] = out.astype(o_ref.dtype)


# ----------------------------------------------------------------------------
# Wrapper
# ----------------------------------------------------------------------------
def neural_net_forward(x, params, *, layers, block_batch=2048, matmul_dtype=None):
    """Runs the fused-MLP Pallas kernel.

    x:       [..., input_dim] float32 (leading dims flattened into the batch)
    params:  list of (W, b) with W: [out_features, in_features],
             b: [out_features, 1]   (torch.nn.Linear layout)
    layers:  as in the torch module (0 => single linear regression layer)
    """
    if matmul_dtype is None:
        matmul_dtype = _default_matmul_dtype()

    lead_shape = x.shape[:-1]
    input_dim = x.shape[-1]
    x2 = x.reshape(-1, input_dim)
    batch = x2.shape[0]
    out_dim = params[-1][0].shape[0]

    # Batch tile: lane-dense multiple of 128, as large as block_batch allows.
    tb = min(block_batch, pl.cdiv(batch, _LANE) * _LANE)
    tb = max(_LANE, (tb // _LANE) * _LANE)
    padded_batch = pl.cdiv(batch, tb) * tb
    grid = (padded_batch // tb,)

    # Transposed batch-in-lanes input; pad ragged batches (sliced off later).
    xT = x2.T                                               # [in, batch]
    if padded_batch != batch:
        xT = jnp.pad(xT, ((0, 0), (0, padded_batch - batch)))

    x_spec = pl.BlockSpec((input_dim, tb), lambda i: (0, i))
    out_spec = pl.BlockSpec((out_dim, tb), lambda i: (0, i))

    def _rep(shape):
        nd = len(shape)
        return pl.BlockSpec(shape, lambda i, _nd=nd: (0,) * _nd)

    if layers != 0:
        num_hidden = layers - 1
        w_in, b_in = params[0]
        w_out, b_out = params[-1]
        args = [xT, w_in, b_in]
        in_specs = [x_spec, _rep(w_in.shape), _rep(b_in.shape)]
        if num_hidden > 0:
            w_h = jnp.stack([w for w, _ in params[1:-1]])   # [nh, n, n]
            b_h = jnp.stack([b for _, b in params[1:-1]])   # [nh, n, 1]
            args += [w_h, b_h]
            in_specs += [_rep(w_h.shape), _rep(b_h.shape)]
        args += [w_out, b_out]
        in_specs += [_rep(w_out.shape), _rep(b_out.shape)]
        kernel = functools.partial(_mlp_kernel, num_hidden, input_dim, matmul_dtype)
    else:
        w, b = params[0]
        args = [xT, w, b]
        in_specs = [x_spec, _rep(w.shape), _rep(b.shape)]
        kernel = functools.partial(_linear_kernel, input_dim, matmul_dtype)

    outT = pl.pallas_call(
        kernel,
        out_shape=jax.ShapeDtypeStruct((out_dim, padded_batch), x.dtype),
        grid_spec=pltpu.PrefetchScalarGridSpec(
            num_scalar_prefetch=0,
            grid=grid,
            in_specs=in_specs,
            out_specs=out_spec,
        ),
        compiler_params=pltpu.CompilerParams(
            dimension_semantics=("parallel",),   # megacore / v7x 2-TC sharding
        ),
    )(*args)

    out = outT.T[:batch]                                    # [batch, out_dim]
    return out.reshape(lead_shape + (out_dim,))


# ----------------------------------------------------------------------------
# Deterministic parameter init (xavier_normal with tanh gain, zero bias)
# ----------------------------------------------------------------------------
def init_params(key, input_dim, output_dim, layers, neurons):
    gain = 5.0 / 3.0  # nn.init.calculate_gain('tanh')

    def xavier(k, out_f, in_f):
        std = gain * (2.0 / (in_f + out_f)) ** 0.5
        return std * jax.random.normal(k, (out_f, in_f), dtype=jnp.float32)

    params = []
    if layers != 0:
        keys = jax.random.split(key, layers + 1)
        params.append((xavier(keys[0], neurons, input_dim),
                       jnp.zeros((neurons, 1), jnp.float32)))
        for l in range(layers - 1):
            params.append((xavier(keys[1 + l], neurons, neurons),
                           jnp.zeros((neurons, 1), jnp.float32)))
        params.append((xavier(keys[layers], output_dim, neurons),
                       jnp.zeros((output_dim, 1), jnp.float32)))
    else:
        params.append((xavier(key, output_dim, input_dim),
                       jnp.zeros((output_dim, 1), jnp.float32)))
    return params


def reference_forward(x, params, layers):
    lead = x.shape[:-1]
    h = x.reshape(-1, x.shape[-1])
    if layers != 0:
        for w, b in params[:-1]:
            h = jnp.tanh(h @ w.T + b.T)
        w, b = params[-1]
        out = h @ w.T + b.T
    else:
        w, b = params[0]
        out = h @ w.T + b.T
    return out.reshape(lead + (w.shape[0],))


# ----------------------------------------------------------------------------
if __name__ == "__main__":
    # Small shapes consistent with the module (fbpinns-style MLP on flat coords).
    batch = 200          # deliberately NOT a multiple of 128: exercises padding
    input_dim = 2
    output_dim = 1
    layers = 3           # input layer + 2 hidden layers + output layer
    neurons = 32

    key = jax.random.PRNGKey(0)
    k_x, k_p, k_p0 = jax.random.split(key, 3)
    x = jax.random.normal(k_x, (batch, input_dim), dtype=jnp.float32)

    # --- MLP path, exact f32 matmuls (tight check) ---------------------------
    params = init_params(k_p, input_dim, output_dim, layers, neurons)
    ref = reference_forward(x, params, layers)

    out_f32 = jax.block_until_ready(
        neural_net_forward(x, params, layers=layers, matmul_dtype=jnp.float32))
    assert out_f32.shape == (batch, output_dim)
    assert jnp.allclose(out_f32, ref, atol=1e-5, rtol=1e-5), "f32 mismatch vs reference"

    # --- MLP path, auto matmul dtype (bf16 MXU operands on v6e/v7x) ----------
    auto_dtype = _default_matmul_dtype()
    out_auto = jax.block_until_ready(neural_net_forward(x, params, layers=layers))
    tol = 5e-2 if auto_dtype == jnp.bfloat16 else 1e-5
    assert jnp.allclose(out_auto, ref, atol=tol, rtol=tol), "auto-dtype mismatch vs reference"

    # --- layers == 0 (simple linear regression) path -------------------------
    params0 = init_params(k_p0, input_dim, output_dim, 0, neurons)
    ref0 = reference_forward(x, params0, 0)
    out0 = jax.block_until_ready(
        neural_net_forward(x, params0, layers=0, matmul_dtype=jnp.float32))
    assert jnp.allclose(out0, ref0, atol=1e-5, rtol=1e-5), "linear-regression mismatch"

    print("KERNEL_OK")
</pallas_src>

<mosaic_0001>
module attributes {stable_mosaic.version = 11 : i64} {
  func.func @_mlp_kernel(%arg0: i32, %arg1: memref<2x256xf32, #tpu.memory_space<vmem>>, %arg2: memref<32x2xf32, #tpu.memory_space<vmem>>, %arg3: memref<32x1xf32, #tpu.memory_space<vmem>>, %arg4: memref<2x32x32xf32, #tpu.memory_space<vmem>>, %arg5: memref<2x32x1xf32, #tpu.memory_space<vmem>>, %arg6: memref<1x32xf32, #tpu.memory_space<vmem>>, %arg7: memref<1x1xf32, #tpu.memory_space<vmem>>, %arg8: memref<1x256xf32, #tpu.memory_space<vmem>>) attributes {dimension_semantics = [#tpu.dimension_semantics<parallel>], iteration_bounds = array<i64: 1>, scalar_prefetch = 0 : i64, scratch_operands = 0 : i64, tpu.core_type = #tpu.core_type<tc>, window_params = [{transform_indices = @transform_0, window_bounds = array<i64: 2, 256>}, {pipeline_mode = #tpu.pipeline_mode<synchronous>, transform_indices = @transform_1, window_bounds = array<i64: 32, 2>}, {pipeline_mode = #tpu.pipeline_mode<synchronous>, transform_indices = @transform_2, window_bounds = array<i64: 32, 1>}, {pipeline_mode = #tpu.pipeline_mode<synchronous>, transform_indices = @transform_3, window_bounds = array<i64: 2, 32, 32>}, {pipeline_mode = #tpu.pipeline_mode<synchronous>, transform_indices = @transform_4, window_bounds = array<i64: 2, 32, 1>}, {pipeline_mode = #tpu.pipeline_mode<synchronous>, transform_indices = @transform_5, window_bounds = array<i64: 1, 32>}, {pipeline_mode = #tpu.pipeline_mode<synchronous>, transform_indices = @transform_6, window_bounds = array<i64: 1, 1>}, {transform_indices = @transform_7, window_bounds = array<i64: 1, 256>}]} {
    %c0 = arith.constant 0 : index
    %c0_0 = arith.constant 0 : index
    %0 = vector.load %arg1[%c0, %c0_0] : memref<2x256xf32, #tpu.memory_space<vmem>>, vector<2x256xf32>
    %c0_1 = arith.constant 0 : index
    %c0_2 = arith.constant 0 : index
    %1 = vector.load %arg2[%c0_1, %c0_2] : memref<32x2xf32, #tpu.memory_space<vmem>>, vector<32x2xf32>
    %c0_3 = arith.constant 0 : index
    %c0_4 = arith.constant 0 : index
    %2 = vector.load %arg3[%c0_3, %c0_4] : memref<32x1xf32, #tpu.memory_space<vmem>>, vector<32x1xf32>
    %3 = vector.extract_strided_slice %1 {offsets = [0, 0], sizes = [32, 1], strides = [1, 1]} : vector<32x2xf32> to vector<32x1xf32>
    %4 = vector.extract_strided_slice %0 {offsets = [0, 0], sizes = [1, 256], strides = [1, 1]} : vector<2x256xf32> to vector<1x256xf32>
    %5 = vector.broadcast %3 : vector<32x1xf32> to vector<32x256xf32>
    %6 = vector.broadcast %4 : vector<1x256xf32> to vector<32x256xf32>
    %7 = arith.mulf %5, %6 : vector<32x256xf32>
    %8 = vector.broadcast %2 : vector<32x1xf32> to vector<32x256xf32>
    %9 = arith.addf %8, %7 : vector<32x256xf32>
    %10 = vector.extract_strided_slice %1 {offsets = [0, 1], sizes = [32, 1], strides = [1, 1]} : vector<32x2xf32> to vector<32x1xf32>
    %11 = vector.extract_strided_slice %0 {offsets = [1, 0], sizes = [1, 256], strides = [1, 1]} : vector<2x256xf32> to vector<1x256xf32>
    %12 = vector.broadcast %10 : vector<32x1xf32> to vector<32x256xf32>
    %13 = vector.broadcast %11 : vector<1x256xf32> to vector<32x256xf32>
    %14 = arith.mulf %12, %13 : vector<32x256xf32>
    %15 = arith.addf %9, %14 : vector<32x256xf32>
    %16 = math.tanh %15 : vector<32x256xf32>
    %c0_5 = arith.constant 0 : index
    %c0_6 = arith.constant 0 : index
    %c0_7 = arith.constant 0 : index
    %17 = vector.load %arg4[%c0_5, %c0_6, %c0_7] : memref<2x32x32xf32, #tpu.memory_space<vmem>>, vector<1x32x32xf32>
    %18 = vector.shape_cast %17 : vector<1x32x32xf32> to vector<32x32xf32>
    %cst = arith.constant dense<0.000000e+00> : vector<32x256xf32>
    %19 = tpu.matmul %18, %16, %cst {dimension_numbers = #tpu.dot_dimension_numbers<[1], [0], [0], [1], [0, 0, 1, 1], [], []>} : vector<32x32xf32>, vector<32x256xf32>, vector<32x256xf32> -> vector<32x256xf32>
    %c0_8 = arith.constant 0 : index
    %c0_9 = arith.constant 0 : index
    %c0_10 = arith.constant 0 : index
    %20 = vector.load %arg5[%c0_8, %c0_9, %c0_10] : memref<2x32x1xf32, #tpu.memory_space<vmem>>, vector<1x32x1xf32>
    %21 = vector.shape_cast %20 : vector<1x32x1xf32> to vector<32x1xf32>
    %22 = vector.broadcast %21 : vector<32x1xf32> to vector<32x256xf32>
    %23 = arith.addf %19, %22 : vector<32x256xf32>
    %24 = math.tanh %23 : vector<32x256xf32>
    %c1 = arith.constant 1 : index
    %c0_11 = arith.constant 0 : index
    %c0_12 = arith.constant 0 : index
    %25 = vector.load %arg4[%c1, %c0_11, %c0_12] : memref<2x32x32xf32, #tpu.memory_space<vmem>>, vector<1x32x32xf32>
    %26 = vector.shape_cast %25 : vector<1x32x32xf32> to vector<32x32xf32>
    %cst_13 = arith.constant dense<0.000000e+00> : vector<32x256xf32>
    %27 = tpu.matmul %26, %24, %cst_13 {dimension_numbers = #tpu.dot_dimension_numbers<[1], [0], [0], [1], [0, 0, 1, 1], [], []>} : vector<32x32xf32>, vector<32x256xf32>, vector<32x256xf32> -> vector<32x256xf32>
    %c1_14 = arith.constant 1 : index
    %c0_15 = arith.constant 0 : index
    %c0_16 = arith.constant 0 : index
    %28 = vector.load %arg5[%c1_14, %c0_15, %c0_16] : memref<2x32x1xf32, #tpu.memory_space<vmem>>, vector<1x32x1xf32>
    %29 = vector.shape_cast %28 : vector<1x32x1xf32> to vector<32x1xf32>
    %30 = vector.broadcast %29 : vector<32x1xf32> to vector<32x256xf32>
    %31 = arith.addf %27, %30 : vector<32x256xf32>
    %32 = math.tanh %31 : vector<32x256xf32>
    %c0_17 = arith.constant 0 : index
    %c0_18 = arith.constant 0 : index
    %33 = vector.load %arg6[%c0_17, %c0_18] : memref<1x32xf32, #tpu.memory_space<vmem>>, vector<1x32xf32>
    %cst_19 = arith.constant dense<0.000000e+00> : vector<1x256xf32>
    %34 = tpu.matmul %33, %32, %cst_19 {dimension_numbers = #tpu.dot_dimension_numbers<[1], [0], [0], [1], [0, 0, 1, 1], [], []>} : vector<1x32xf32>, vector<32x256xf32>, vector<1x256xf32> -> vector<1x256xf32>
    %c0_20 = arith.constant 0 : index
    %c0_21 = arith.constant 0 : index
    %35 = vector.load %arg7[%c0_20, %c0_21] : memref<1x1xf32, #tpu.memory_space<vmem>>, vector<1x1xf32>
    %36 = vector.broadcast %35 : vector<1x1xf32> to vector<1x256xf32>
    %37 = arith.addf %34, %36 : vector<1x256xf32>
    %c0_22 = arith.constant 0 : index
    %c0_23 = arith.constant 0 : index
    %38 = vector.load %arg8[%c0_22, %c0_23] : memref<1x256xf32, #tpu.memory_space<vmem>>, vector<1x256xf32>
    tpu.vector_store %arg8[%c0_22, %c0_23], %37 {strides = array<i32>} : memref<1x256xf32, #tpu.memory_space<vmem>>, vector<1x256xf32>,
    return
  }
  func.func @transform_0(%arg0: i32) -> (i32, i32) {
    %c0_i32 = arith.constant 0 : i32
    %c0_i32_0 = arith.constant 0 : i32
    return %c0_i32, %arg0 : i32, i32
  }
  func.func @transform_1(%arg0: i32) -> (i32, i32) {
    %c0_i32 = arith.constant 0 : i32
    %c0_i32_0 = arith.constant 0 : i32
    %c0_i32_1 = arith.constant 0 : i32
    return %c0_i32, %c0_i32_0 : i32, i32
  }
  func.func @transform_2(%arg0: i32) -> (i32, i32) {
    %c0_i32 = arith.constant 0 : i32
    %c0_i32_0 = arith.constant 0 : i32
    %c0_i32_1 = arith.constant 0 : i32
    return %c0_i32, %c0_i32_0 : i32, i32
  }
  func.func @transform_3(%arg0: i32) -> (i32, i32, i32) {
    %c0_i32 = arith.constant 0 : i32
    %c0_i32_0 = arith.constant 0 : i32
    %c0_i32_1 = arith.constant 0 : i32
    %c0_i32_2 = arith.constant 0 : i32
    return %c0_i32, %c0_i32_0, %c0_i32_1 : i32, i32, i32
  }
  func.func @transform_4(%arg0: i32) -> (i32, i32, i32) {
    %c0_i32 = arith.constant 0 : i32
    %c0_i32_0 = arith.constant 0 : i32
    %c0_i32_1 = arith.constant 0 : i32
    %c0_i32_2 = arith.constant 0 : i32
    return %c0_i32, %c0_i32_0, %c0_i32_1 : i32, i32, i32
  }
  func.func @transform_5(%arg0: i32) -> (i32, i32) {
    %c0_i32 = arith.constant 0 : i32
    %c0_i32_0 = arith.constant 0 : i32
    %c0_i32_1 = arith.constant 0 : i32
    return %c0_i32, %c0_i32_0 : i32, i32
  }
  func.func @transform_6(%arg0: i32) -> (i32, i32) {
    %c0_i32 = arith.constant 0 : i32
    %c0_i32_0 = arith.constant 0 : i32
    %c0_i32_1 = arith.constant 0 : i32
    return %c0_i32, %c0_i32_0 : i32, i32
  }
  func.func @transform_7(%arg0: i32) -> (i32, i32) {
    %c0_i32 = arith.constant 0 : i32
    %c0_i32_0 = arith.constant 0 : i32
    return %c0_i32, %arg0 : i32, i32
  }
}

</mosaic_0001>

<llo_original>
// kernel: tpu_custom_call.1
$region0: #{tpu_custom_call.1}
  #allocation0 [shape = 'u32[]', space=smem, size = 0x4, offset = 0x4, fixed_abs, tag = 'smem constant byte address 0x4 - core index']
  #allocation1 [shape = 'u32[144,128]{1,0:T(1,128)}', space=vmem, size = 0x12000, scoped, tag = 'internal scratch']
  #allocation2 [shape = 'f32[1,1]{1,0:T(1,128)S(1)}', space=vmem, size = 0x200, scoped, tag = 'scoped memory for tpu_custom_call.1']
  %s0 = inlined_call_operand.vmem [shape: f32[2,256], index: 0, kind: input, shape index: {}]
  %s1 = inlined_call_operand.vmem [shape: f32[32,2], index: 1, kind: input, shape index: {}]
  %s2 = inlined_call_operand.vmem [shape: f32[32,1], index: 2, kind: input, shape index: {}]
  %s3 = inlined_call_operand.vmem [shape: f32[2,32,32], index: 3, kind: input, shape index: {}]
  %s4 = inlined_call_operand.vmem [shape: f32[2,32,1], index: 4, kind: input, shape index: {}]
  %s5 = inlined_call_operand.vmem [shape: f32[1,32], index: 5, kind: input, shape index: {}]
  %s6 = inlined_call_operand.<no memory space> [shape: f32[1,1], index: 6, kind: input, shape index: {}]
  %s7 = inlined_call_operand.hbm [shape: f32[1,256], index: 7, kind: output, shape index: {}]
  %s8 = sld [smem:[#allocation0]]
  $region38: #{tpu_custom_call.1} parent=0
    _
  %s10 = ssub.s32 1, %s8
  %s11 = scalar_select 0, %s10, %s8
  %v12 = vstv %s6
  %13 = vst [vmem:[#allocation2] sm:$0x1] %v12
  $region1: #{tpu_custom_call.1} parent=0
    #allocation3 [shape = 'u8[1024]{0}', space=vmem, size = 0x400, scoped, tag = 'output window, operand 0, single buffered']
    #allocation4 [shape = 's32[1]{0}', space=sflag, size = 0x4, scoped, tag = 'scoped memory for tpu_custom_call.1']
    %14 = vsyncpa [#allocation4], 0
    // Predicated region
    $region2: #{tpu_custom_call.1} parent=1 // pred_check
      _
    $region3: #{tpu_custom_call.1} parent=1 // pred_check_branch
      %16 = sbr.rel (0) target = $region5
    $region4: #{tpu_custom_call.1} parent=1 // pred_region
      _
    $region5: #{tpu_custom_call.1} parent=1 // pred_fallthru
      _
    // Predicated region
    $region6: #{tpu_custom_call.1} parent=1 // pred_check
      _
    $region7: #{tpu_custom_call.1} parent=1 // pred_check_branch
      %18 = sbr.rel (0) target = $region9
    $region8: #{tpu_custom_call.1} parent=1 // pred_region
      _
    $region9: #{tpu_custom_call.1} parent=1 // pred_fallthru
      _
    // Predicated region
    $region10: #{tpu_custom_call.1} parent=1 // pred_check
      _
    $region11: #{tpu_custom_call.1} parent=1 // pred_check_branch
      %20 = sbr.rel (0) target = $region13
    $region12: #{tpu_custom_call.1} parent=1 // pred_region
      _
    $region13: #{tpu_custom_call.1} parent=1 // pred_fallthru
      _
    // Predicated region
    $region14: #{tpu_custom_call.1} parent=1 // pred_check
      _
    $region15: #{tpu_custom_call.1} parent=1 // pred_check_branch
      %22 = sbr.rel (0) target = $region17
    $region16: #{tpu_custom_call.1} parent=1 // pred_region
      _
    $region17: #{tpu_custom_call.1} parent=1 // pred_fallthru
      _
    // Predicated region
    $region18: #{tpu_custom_call.1} parent=1 // pred_check
      _
    $region19: #{tpu_custom_call.1} parent=1 // pred_check_branch
      %24 = sbr.rel (0) target = $region21
    $region20: #{tpu_custom_call.1} parent=1 // pred_region
      _
    $region21: #{tpu_custom_call.1} parent=1 // pred_fallthru
      _
    // Predicated region
    $region22: #{tpu_custom_call.1} parent=1 // pred_check
      _
    $region23: #{tpu_custom_call.1} parent=1 // pred_check_branch
      %26 = sbr.rel (0) target = $region25
    $region24: #{tpu_custom_call.1} parent=1 // pred_region
      _
    $region25: #{tpu_custom_call.1} parent=1 // pred_fallthru
      _
    // Predicated region
    $region26: #{tpu_custom_call.1} parent=1 // pred_check
      _
    $region27: #{tpu_custom_call.1} parent=1 // pred_check_branch
      %28 = sbr.rel (0) target = $region29
    $region28: #{tpu_custom_call.1} parent=1 // pred_region
      _
    $region29: #{tpu_custom_call.1} parent=1 // pred_fallthru
      _
    %v29 = vld [vmem:[%s0] sm:$0xf]
    %v30 = vld [vmem:[%s1] sm:$0xff]
    %v31 = vld [vmem:[%s1 + $0x8] sm:$0xff]
    %v32 = vld [vmem:[%s1 + $0x10] sm:$0xff]
    %v33 = vld [vmem:[%s1 + $0x18] sm:$0xff]
    %v34 = vld [vmem:[%s2] sm:$0xff]
    %v35 = vld [vmem:[%s2 + $0x8] sm:$0xff]
    %v36 = vld [vmem:[%s2 + $0x10] sm:$0xff]
    %v37 = vld [vmem:[%s2 + $0x18] sm:$0xff]
    %39 = vset.pattern.permute.xlu0 0
    %40 = vperm.xlu0 %39, %v30
    %v41 = vpop.permute.xlu0 %40
    %44 = vset.pattern.permute.xlu0 0
    %45 = vperm.xlu0 %44, %v31
    %v46 = vpop.permute.xlu0 %45
    %49 = vset.pattern.permute.xlu0 0
    %50 = vperm.xlu0 %49, %v32
    %v51 = vpop.permute.xlu0 %50
    %54 = vset.pattern.permute.xlu0 0
    %55 = vperm.xlu0 %54, %v33
    %v56 = vpop.permute.xlu0 %55
    %v59 = vlaneseq
    %v60 = vshrl.u32 %v59, 7
    %v61 = vsub.s32 0, %v60
    %v62 = vrot.slane %v29, %v61
    %v63 = vlaneseq
    %v64 = vshrl.u32 %v63, 7
    %v65 = vsub.s32 2, %v64
    %v66 = vrot.slane %v29, %v65
    %v69 = vlaneseq
    %v70 = vshrl.u32 %v69, 7
    %v71 = vsub.s32 0, %v70
    %v72 = vrot.slane %v62, %v71
    %v73 = vlaneseq
    %v74 = vshrl.u32 %v73, 7
    %v75 = vsub.s32 0, %v74
    %v76 = vrot.slane %v66, %v75
    %v77 = vmul.f32 %v41, %v72
    %v78 = vmul.f32 %v41, %v76
    %v79 = vmul.f32 %v46, %v72
    %v80 = vmul.f32 %v46, %v76
    %v81 = vmul.f32 %v51, %v72
    %v82 = vmul.f32 %v51, %v76
    %v83 = vmul.f32 %v56, %v72
    %v84 = vmul.f32 %v56, %v76
    %86 = vset.pattern.permute.xlu0 0
    %87 = vperm.xlu0 %86, %v34
    %v88 = vpop.permute.xlu0 %87
    %91 = vset.pattern.permute.xlu0 0
    %92 = vperm.xlu0 %91, %v35
    %v93 = vpop.permute.xlu0 %92
    %96 = vset.pattern.permute.xlu0 0
    %97 = vperm.xlu0 %96, %v36
    %v98 = vpop.permute.xlu0 %97
    %101 = vset.pattern.permute.xlu0 0
    %102 = vperm.xlu0 %101, %v37
    %v103 = vpop.permute.xlu0 %102
    %v105 = vadd.f32 %v88, %v77
    %v106 = vadd.f32 %v88, %v78
    %v107 = vadd.f32 %v93, %v79
    %v108 = vadd.f32 %v93, %v80
    %v109 = vadd.f32 %v98, %v81
    %v110 = vadd.f32 %v98, %v82
    %v111 = vadd.f32 %v103, %v83
    %v112 = vadd.f32 %v103, %v84
    %113 = vset.pattern.permute.xlu0 1
    %114 = vperm.xlu0 %113, %v30
    %v115 = vpop.permute.xlu0 %114
    %117 = vset.pattern.permute.xlu0 1
    %118 = vperm.xlu0 %117, %v31
    %v119 = vpop.permute.xlu0 %118
    %121 = vset.pattern.permute.xlu0 1
    %122 = vperm.xlu0 %121, %v32
    %v123 = vpop.permute.xlu0 %122
    %125 = vset.pattern.permute.xlu0 1
    %126 = vperm.xlu0 %125, %v33
    %v127 = vpop.permute.xlu0 %126
    %v129 = vlaneseq
    %v130 = vshrl.u32 %v129, 7
    %v131 = vsub.s32 1, %v130
    %v132 = vrot.slane %v29, %v131
    %v133 = vlaneseq
    %v134 = vshrl.u32 %v133, 7
    %v135 = vsub.s32 3, %v134
    %v136 = vrot.slane %v29, %v135
    %v139 = vlaneseq
    %v140 = vshrl.u32 %v139, 7
    %v141 = vsub.s32 1, %v140
    %v142 = vrot.slane %v132, %v141
    %v143 = vlaneseq
    %v144 = vshrl.u32 %v143, 7
    %v145 = vsub.s32 1, %v144
    %v146 = vrot.slane %v136, %v145
    %v147 = vmul.f32 %v115, %v142
    %v148 = vmul.f32 %v115, %v146
    %v149 = vmul.f32 %v119, %v142
    %v150 = vmul.f32 %v119, %v146
    %v151 = vmul.f32 %v123, %v142
    %v152 = vmul.f32 %v123, %v146
    %v153 = vmul.f32 %v127, %v142
    %v154 = vmul.f32 %v127, %v146
    %v155 = vadd.f32 %v105, %v147
    %v156 = vadd.f32 %v106, %v148
    %v157 = vadd.f32 %v107, %v149
    %v158 = vadd.f32 %v108, %v150
    %v159 = vadd.f32 %v109, %v151
    %v160 = vadd.f32 %v110, %v152
    %v161 = vadd.f32 %v111, %v153
    %v162 = vadd.f32 %v112, %v154
    %v163 = vtanh.pop %v155
    %v164 = vtanh.pop %v156
    %v165 = vtanh.pop %v157
    %v166 = vtanh.pop %v158
    %v167 = vtanh.pop %v159
    %v168 = vtanh.pop %v160
    %v169 = vtanh.pop %v161
    %v170 = vtanh.pop %v162
    %v171 = vld [vmem:[%s3] sm:$0xff]
    %v172 = vld [vmem:[%s3 + $0x8] sm:$0xff]
    %v173 = vld [vmem:[%s3 + $0x10] sm:$0xff]
    %v174 = vld [vmem:[%s3 + $0x18] sm:$0xff]
    %v175 = vld [vmem:[%s4] sm:$0xff]
    %v176 = vld [vmem:[%s4 + $0x8] sm:$0xff]
    %v177 = vld [vmem:[%s4 + $0x10] sm:$0xff]
    %v178 = vld [vmem:[%s4 + $0x18] sm:$0xff]
    %180 = vset.pattern.permute.xlu0 0
    %181 = vperm.xlu0 %180, %v175
    %v182 = vpop.permute.xlu0 %181
    %185 = vset.pattern.permute.xlu0 0
    %186 = vperm.xlu0 %185, %v176
    %v187 = vpop.permute.xlu0 %186
    %190 = vset.pattern.permute.xlu0 0
    %191 = vperm.xlu0 %190, %v177
    %v192 = vpop.permute.xlu0 %191
    %195 = vset.pattern.permute.xlu0 0
    %196 = vperm.xlu0 %195, %v178
    %v197 = vpop.permute.xlu0 %196
    %vm199 = vcmask 261120
    %v201 = vsel %vm199, %v171, 0
    %v204 = vsel %vm199, %v172, 0
    %v207 = vsel %vm199, %v173, 0
    %v210 = vsel %vm199, %v174, 0
    %212 = vmatprep.subr.mxu0 %v164
    %213 = vmatpush1.msra.mxu0 %v163
    %214 = vmatprep.subr.mxu0 %v166
    %215 = vmatpush1.msra.mxu0 %v165
    %216 = vmatprep.subr.mxu0 %v168
    %217 = vmatpush1.msra.mxu0 %v167
    %218 = vmatprep.subr.mxu0 %v170
    %219 = vmatpush1.msra.mxu0 %v169
    %220 = vmatprep.subr.mxu0 0.0
    %221 = vmatpush1.msra.mxu0 0.0
    %222 = vmatprep.subr.mxu0 0.0
    %223 = vmatpush1.msra.mxu0 0.0
    %224 = vmatprep.subr.mxu0 0.0
    %225 = vmatpush1.msra.mxu0 0.0
    %226 = vmatprep.subr.mxu0 0.0
    %227 = vmatpush1.msra.mxu0 0.0
    %228 = vmatprep.subr.mxu0 0.0
    %229 = vmatpush1.msra.mxu0 0.0
    %230 = vmatprep.subr.mxu0 0.0
    %231 = vmatpush1.msra.mxu0 0.0
    %232 = vmatprep.subr.mxu0 0.0
    %233 = vmatpush1.msra.mxu0 0.0
    %234 = vmatprep.subr.mxu0 0.0
    %235 = vmatpush1.msra.mxu0 0.0
    %236 = vmatprep.subr.mxu0 0.0
    %237 = vmatpush1.msra.mxu0 0.0
    %238 = vmatprep.subr.mxu0 0.0
    %239 = vmatpush1.msra.mxu0 0.0
    %240 = vmatprep.subr.mxu0 0.0
    %241 = vmatpush1.msra.mxu0 0.0
    %242 = vmatprep.subr.mxu0 0.0
    %243 = vmatpush1.msra.mxu0 0.0
    %244 = vmatprep.subr.mxu0 0.0
    %245 = vmatpush1.msra.mxu0 0.0
    %246 = vmatprep.subr.mxu0 0.0
    %247 = vmatpush1.msra.mxu0 0.0
    %248 = vmatprep.subr.mxu0 0.0
    %249 = vmatpush1.msra.mxu0 0.0
    %250 = vmatprep.subr.mxu0 0.0
    %251 = vmatpush1.msra.mxu0 0.0
    %252 = vmatprep.subr.mxu0 0.0
    %253 = vmatpush1.msra.mxu0 0.0
    %254 = vmatprep.subr.mxu0 0.0
    %255 = vmatpush1.msra.mxu0 0.0
    %256 = vmatprep.subr.mxu0 0.0
    %257 = vmatpush1.msra.mxu0 0.0
    %258 = vmatprep.subr.mxu0 0.0
    %259 = vmatpush1.msra.mxu0 0.0
    %260 = vmatprep.subr.mxu0 0.0
    %261 = vmatpush1.msra.mxu0 0.0
    %262 = vmatprep.subr.mxu0 0.0
    %263 = vmatpush1.msra.mxu0 0.0
    %264 = vmatprep.subr.mxu0 0.0
    %265 = vmatpush1.msra.mxu0 0.0
    %266 = vmatprep.subr.mxu0 0.0
    %267 = vmatpush1.msra.mxu0 0.0
    %268 = vmatprep.subr.mxu0 0.0
    %269 = vmatpush1.msra.mxu0 0.0
    %270 = vmatprep.subr.mxu0 0.0
    %271 = vmatpush1.msra.mxu0 0.0
    %272 = vmatprep.subr.mxu0 0.0
    %273 = vmatpush1.msra.mxu0 0.0
    %274 = vmatprep.subr.mxu0 0.0
    %275 = vmatpush1.msra.mxu0 0.0
    %276 = vmatprep.mubr.f32.mxu0 0.0
    %277 = vmatmul.mubr.f32.gmra.mrb[0].mxu0 %v201
    %v278 = vpop.f32.mrb[0].mxu0
    %v279 = vadd.f32 %v182, %v278
    %v280 = vpop.f32.mrb[0].mxu0
    %v281 = vadd.f32 %v182, %v280
    %282 = vmatprep.mubr.f32.mxu0 0.0
    %283 = vmatmul.mubr.f32.gmra.mrb[0].mxu0 %v204
    %v284 = vpop.f32.mrb[0].mxu0
    %v285 = vadd.f32 %v187, %v284
    %v286 = vpop.f32.mrb[0].mxu0
    %v287 = vadd.f32 %v187, %v286
    %288 = vmatprep.mubr.f32.mxu0 0.0
    %289 = vmatmul.mubr.f32.gmra.mrb[0].mxu0 %v207
    %v290 = vpop.f32.mrb[0].mxu0
    %v291 = vadd.f32 %v192, %v290
    %v292 = vpop.f32.mrb[0].mxu0
    %v293 = vadd.f32 %v192, %v292
    %294 = vmatprep.mubr.f32.mxu0 0.0
    %295 = vmatmul.mubr.f32.gmra.mrb[0].mxu0 %v210
    %v296 = vpop.f32.mrb[0].mxu0
    %v297 = vadd.f32 %v197, %v296
    %v298 = vpop.f32.mrb[0].mxu0
    %v299 = vadd.f32 %v197, %v298
    %300 = vdwg.mxu0
    %v301 = vtanh.pop %v279
    %v302 = vtanh.pop %v281
    %v303 = vtanh.pop %v285
    %v304 = vtanh.pop %v287
    %v305 = vtanh.pop %v291
    %v306 = vtanh.pop %v293
    %v307 = vtanh.pop %v297
    %v308 = vtanh.pop %v299
    %s309 = scalar_lea.vmem %s3, 32
    %v310 = vld [vmem:[%s309] sm:$0xff]
    %v311 = vld [vmem:[%s309 + $0x8] sm:$0xff]
    %v312 = vld [vmem:[%s309 + $0x10] sm:$0xff]
    %v313 = vld [vmem:[%s309 + $0x18] sm:$0xff]
    %s314 = scalar_lea.vmem %s4, 32
    %v315 = vld [vmem:[%s314] sm:$0xff]
    %v316 = vld [vmem:[%s314 + $0x8] sm:$0xff]
    %v317 = vld [vmem:[%s314 + $0x10] sm:$0xff]
    %v318 = vld [vmem:[%s314 + $0x18] sm:$0xff]
    %320 = vset.pattern.permute.xlu0 0
    %321 = vperm.xlu0 %320, %v315
    %v322 = vpop.permute.xlu0 %321
    %325 = vset.pattern.permute.xlu0 0
    %326 = vperm.xlu0 %325, %v316
    %v327 = vpop.permute.xlu0 %326
    %330 = vset.pattern.permute.xlu0 0
    %331 = vperm.xlu0 %330, %v317
    %v332 = vpop.permute.xlu0 %331
    %335 = vset.pattern.permute.xlu0 0
    %336 = vperm.xlu0 %335, %v318
    %v337 = vpop.permute.xlu0 %336
    %v340 = vsel %vm199, %v310, 0
    %v343 = vsel %vm199, %v311, 0
    %v346 = vsel %vm199, %v312, 0
    %v349 = vsel %vm199, %v313, 0
    %351 = vmatprep.subr.mxu0 %v302
    %352 = vmatpush1.msra.mxu0 %v301
    %353 = vmatprep.subr.mxu0 %v304
    %354 = vmatpush1.msra.mxu0 %v303
    %355 = vmatprep.subr.mxu0 %v306
    %356 = vmatpush1.msra.mxu0 %v305
    %357 = vmatprep.subr.mxu0 %v308
    %358 = vmatpush1.msra.mxu0 %v307
    %359 = vmatprep.subr.mxu0 0.0
    %360 = vmatpush1.msra.mxu0 0.0
    %361 = vmatprep.subr.mxu0 0.0
    %362 = vmatpush1.msra.mxu0 0.0
    %363 = vmatprep.subr.mxu0 0.0
    %364 = vmatpush1.msra.mxu0 0.0
    %365 = vmatprep.subr.mxu0 0.0
    %366 = vmatpush1.msra.mxu0 0.0
    %367 = vmatprep.subr.mxu0 0.0
    %368 = vmatpush1.msra.mxu0 0.0
    %369 = vmatprep.subr.mxu0 0.0
    %370 = vmatpush1.msra.mxu0 0.0
    %371 = vmatprep.subr.mxu0 0.0
    %372 = vmatpush1.msra.mxu0 0.0
    %373 = vmatprep.subr.mxu0 0.0
    %374 = vmatpush1.msra.mxu0 0.0
    %375 = vmatprep.subr.mxu0 0.0
    %376 = vmatpush1.msra.mxu0 0.0
    %377 = vmatprep.subr.mxu0 0.0
    %378 = vmatpush1.msra.mxu0 0.0
    %379 = vmatprep.subr.mxu0 0.0
    %380 = vmatpush1.msra.mxu0 0.0
    %381 = vmatprep.subr.mxu0 0.0
    %382 = vmatpush1.msra.mxu0 0.0
    %383 = vmatprep.subr.mxu0 0.0
    %384 = vmatpush1.msra.mxu0 0.0
    %385 = vmatprep.subr.mxu0 0.0
    %386 = vmatpush1.msra.mxu0 0.0
    %387 = vmatprep.subr.mxu0 0.0
    %388 = vmatpush1.msra.mxu0 0.0
    %389 = vmatprep.subr.mxu0 0.0
    %390 = vmatpush1.msra.mxu0 0.0
    %391 = vmatprep.subr.mxu0 0.0
    %392 = vmatpush1.msra.mxu0 0.0
    %393 = vmatprep.subr.mxu0 0.0
    %394 = vmatpush1.msra.mxu0 0.0
    %395 = vmatprep.subr.mxu0 0.0
    %396 = vmatpush1.msra.mxu0 0.0
    %397 = vmatprep.subr.mxu0 0.0
    %398 = vmatpush1.msra.mxu0 0.0
    %399 = vmatprep.subr.mxu0 0.0
    %400 = vmatpush1.msra.mxu0 0.0
    %401 = vmatprep.subr.mxu0 0.0
    %402 = vmatpush1.msra.mxu0 0.0
    %403 = vmatprep.subr.mxu0 0.0
    %404 = vmatpush1.msra.mxu0 0.0
    %405 = vmatprep.subr.mxu0 0.0
    %406 = vmatpush1.msra.mxu0 0.0
    %407 = vmatprep.subr.mxu0 0.0
    %408 = vmatpush1.msra.mxu0 0.0
    %409 = vmatprep.subr.mxu0 0.0
    %410 = vmatpush1.msra.mxu0 0.0
    %411 = vmatprep.subr.mxu0 0.0
    %412 = vmatpush1.msra.mxu0 0.0
    %413 = vmatprep.subr.mxu0 0.0
    %414 = vmatpush1.msra.mxu0 0.0
    %415 = vmatprep.mubr.f32.mxu0 0.0
    %416 = vmatmul.mubr.f32.gmra.mrb[0].mxu0 %v340
    %v417 = vpop.f32.mrb[0].mxu0
    %v418 = vadd.f32 %v322, %v417
    %v419 = vpop.f32.mrb[0].mxu0
    %v420 = vadd.f32 %v322, %v419
    %421 = vmatprep.mubr.f32.mxu0 0.0
    %422 = vmatmul.mubr.f32.gmra.mrb[0].mxu0 %v343
    %v423 = vpop.f32.mrb[0].mxu0
    %v424 = vadd.f32 %v327, %v423
    %v425 = vpop.f32.mrb[0].mxu0
    %v426 = vadd.f32 %v327, %v425
    %427 = vmatprep.mubr.f32.mxu0 0.0
    %428 = vmatmul.mubr.f32.gmra.mrb[0].mxu0 %v346
    %v429 = vpop.f32.mrb[0].mxu0
    %v430 = vadd.f32 %v332, %v429
    %v431 = vpop.f32.mrb[0].mxu0
    %v432 = vadd.f32 %v332, %v431
    %433 = vmatprep.mubr.f32.mxu0 0.0
    %434 = vmatmul.mubr.f32.gmra.mrb[0].mxu0 %v349
    %v435 = vpop.f32.mrb[0].mxu0
    %v436 = vadd.f32 %v337, %v435
    %v437 = vpop.f32.mrb[0].mxu0
    %v438 = vadd.f32 %v337, %v437
    %439 = vdwg.mxu0
    %v440 = vtanh.pop %v418
    %v441 = vtanh.pop %v420
    %v442 = vtanh.pop %v424
    %v443 = vtanh.pop %v426
    %v444 = vtanh.pop %v430
    %v445 = vtanh.pop %v432
    %v446 = vtanh.pop %v436
    %v447 = vtanh.pop %v438
    %v448 = vld [vmem:[%s5] sm:$0x1]
    %v449 = vld [vmem:[#allocation2] sm:$0x1]
    %451 = vset.pattern.permute.xlu0 0
    %452 = vperm.xlu0 %451, %v449
    %v453 = vpop.permute.xlu0 %452
    %v455 = vlaneseq
    %v456 = vshrl.u32 %v455, 7
    %v457 = vsub.s32 0, %v456
    %v458 = vrot.slane %v453, %v457
    %v460 = vsel %vm199, %v448, 0
    %462 = vmatprep.subr.mxu0 %v441
    %463 = vmatpush1.msra.mxu0 %v440
    %464 = vmatprep.subr.mxu0 %v443
    %465 = vmatpush1.msra.mxu0 %v442
    %466 = vmatprep.subr.mxu0 %v445
    %467 = vmatpush1.msra.mxu0 %v444
    %468 = vmatprep.subr.mxu0 %v447
    %469 = vmatpush1.msra.mxu0 %v446
    %470 = vmatprep.subr.mxu0 0.0
    %471 = vmatpush1.msra.mxu0 0.0
    %472 = vmatprep.subr.mxu0 0.0
    %473 = vmatpush1.msra.mxu0 0.0
    %474 = vmatprep.subr.mxu0 0.0
    %475 = vmatpush1.msra.mxu0 0.0
    %476 = vmatprep.subr.mxu0 0.0
    %477 = vmatpush1.msra.mxu0 0.0
    %478 = vmatprep.subr.mxu0 0.0
    %479 = vmatpush1.msra.mxu0 0.0
    %480 = vmatprep.subr.mxu0 0.0
    %481 = vmatpush1.msra.mxu0 0.0
    %482 = vmatprep.subr.mxu0 0.0
    %483 = vmatpush1.msra.mxu0 0.0
    %484 = vmatprep.subr.mxu0 0.0
    %485 = vmatpush1.msra.mxu0 0.0
    %486 = vmatprep.subr.mxu0 0.0
    %487 = vmatpush1.msra.mxu0 0.0
    %488 = vmatprep.subr.mxu0 0.0
    %489 = vmatpush1.msra.mxu0 0.0
    %490 = vmatprep.subr.mxu0 0.0
    %491 = vmatpush1.msra.mxu0 0.0
    %492 = vmatprep.subr.mxu0 0.0
    %493 = vmatpush1.msra.mxu0 0.0
    %494 = vmatprep.subr.mxu0 0.0
    %495 = vmatpush1.msra.mxu0 0.0
    %496 = vmatprep.subr.mxu0 0.0
    %497 = vmatpush1.msra.mxu0 0.0
    %498 = vmatprep.subr.mxu0 0.0
    %499 = vmatpush1.msra.mxu0 0.0
    %500 = vmatprep.subr.mxu0 0.0
    %501 = vmatpush1.msra.mxu0 0.0
    %502 = vmatprep.subr.mxu0 0.0
    %503 = vmatpush1.msra.mxu0 0.0
    %504 = vmatprep.subr.mxu0 0.0
    %505 = vmatpush1.msra.mxu0 0.0
    %506 = vmatprep.subr.mxu0 0.0
    %507 = vmatpush1.msra.mxu0 0.0
    %508 = vmatprep.subr.mxu0 0.0
    %509 = vmatpush1.msra.mxu0 0.0
    %510 = vmatprep.subr.mxu0 0.0
    %511 = vmatpush1.msra.mxu0 0.0
    %512 = vmatprep.subr.mxu0 0.0
    %513 = vmatpush1.msra.mxu0 0.0
    %514 = vmatprep.subr.mxu0 0.0
    %515 = vmatpush1.msra.mxu0 0.0
    %516 = vmatprep.subr.mxu0 0.0
    %517 = vmatpush1.msra.mxu0 0.0
    %518 = vmatprep.subr.mxu0 0.0
    %519 = vmatpush1.msra.mxu0 0.0
    %520 = vmatprep.subr.mxu0 0.0
    %521 = vmatpush1.msra.mxu0 0.0
    %522 = vmatprep.subr.mxu0 0.0
    %523 = vmatpush1.msra.mxu0 0.0
    %524 = vmatprep.subr.mxu0 0.0
    %525 = vmatpush1.msra.mxu0 0.0
    %526 = vmatprep.mubr.f32.mxu0 0.0
    %527 = vmatmul.mubr.f32.gmra.mrb[0].mxu0 %v460
    %v528 = vpop.f32.mrb[0].mxu0
    %v529 = vadd.f32 %v458, %v528
    %v530 = vpop.f32.mrb[0].mxu0
    %v531 = vadd.f32 %v458, %v530
    %532 = vdwg.mxu0
    %v535 = vcombine.low %v529, %v531
    %v537 = vunpack.c.l.s4 1966171168
    %v538 = vunpack.c.0.s8 %v537
    %v539 = vlaneseq
    %v540 = vshrl.u32 %v539, 7
    %v541 = vsub.s32 %v538, %v540
    %v542 = vrot.slane %v535, %v541
    %v544 = vunpack.c.l.s4 1966171168
    %v545 = vunpack.c.0.s8 %v544
    %v546 = vlaneseq
    %v547 = vshrl.u32 %v546, 7
    %v548 = vsub.s32 %v545, %v547
    %v549 = vrot.slane %v542, %v548
    %v551 = vlaneseq
    %vm552 = vcmp.ge.s32.totalorder %v551, 0
    %vm553 = vcmp.lt.s32.totalorder %v551, 256
    %vm554 = vmand %vm552, %vm553
    %555 = vst.msk [vmem:[#allocation3] sm:$0x3] %vm554, %v549
    // Predicated region
    $region30: #{tpu_custom_call.1} parent=1 // pred_check
      _
    $region31: #{tpu_custom_call.1} parent=1 // pred_check_branch
      %557 = sbr.rel (0) target = $region33
    $region32: #{tpu_custom_call.1} parent=1 // pred_region
      %s559 = ssub.s32 32, 32
      %560 = vsyncadd [#allocation4], %s559
      %s562 = sshll.u32 [#allocation3], 4
      %s563 = int_to_ptr.vmem [resolvable:$true] %s562
      %565 = dma.vmem_to_hbm [thread:$0]  %s563, 32, %s7, [#allocation4]
    $region33: #{tpu_custom_call.1} parent=1 // pred_fallthru
      _
    // Predicated region
    $region34: #{tpu_custom_call.1} parent=1 // pred_check
      _
    $region35: #{tpu_custom_call.1} parent=1 // pred_check_branch
      %567 = sbr.rel (0) target = $region37
    $region36: #{tpu_custom_call.1} parent=1 // pred_region
      %568 = dma.done [#allocation4], 32
    $region37: #{tpu_custom_call.1} parent=1 // pred_fallthru
      _
    %569 = vsyncpa [#allocation4], 1

</llo_original>
